<compile_context>
chip_gen: v5e
topology: v5e:2x2
jax: 0.10.0
libtpu: 0.0.40
codegen_flags: <defaults>
</compile_context>

<pallas_src>
import jax
import jax.numpy as jnp
from jax import lax
from jax.experimental import pallas as pl
from jax.experimental.pallas import tpu as pltpu

BN_EPS = 1e-5
LANES = 128
STAT_GROUPS = 2           # leading "parallel" grid axis: 2 TensorCores on v7x


def _round_up(x, m):
    return ((x + m - 1) // m) * m


def _cdiv(a, b):
    return -(-a // b)


def _vmem_info():
    """(physical VMEM bytes, scoped-VMEM limit to request)."""
    cap = 128 * 1024 * 1024
    try:
        info = pltpu.get_tpu_info()
        cap_attr = getattr(info, "vmem_capacity_bytes", None)
        if cap_attr:
            cap = int(cap_attr)
    except Exception:
        pass
    # v7x: 64 MiB physical -> 48 MiB limit; v5e/v6e: 128 MiB -> 96 MiB.
    limit = min((cap * 3) // 4, 96 * 1024 * 1024)
    return cap, limit


def _pick_tile_m(k_pad, out_cols, out_bytes, store_conv, vmem_cap, vmem_limit):
    """Rows per tile: biggest that keeps the streamed, double-buffered tiles
    within a fraction of the scoped-VMEM budget; capped per generation
    (v7x 64 MiB VMEM -> 512, v5e/v6e 128 MiB -> 1024)."""
    per_row = 2 * (k_pad * 2)                  # patches tile, bf16, x2 buffers
    per_row += 2 * (out_cols * out_bytes)      # output tile
    if store_conv:
        per_row += 2 * (out_cols * 2)          # bf16 conv intermediate tile
    budget = max(4 * 1024 * 1024, vmem_limit // 4)
    tm_max = 512 if vmem_cap <= 64 * 1024 * 1024 else 1024
    tm = (budget // per_row) // LANES * LANES
    return int(max(LANES, min(tm_max, tm)))


# --------------------------------------------------------------------------
# Kernels
# --------------------------------------------------------------------------
def _make_fused_kernel(true_m):
    """Small-instance path: one grid step doing conv + training-mode BN batch
    statistics + fused affine + ReLU."""
    inv_n = 1.0 / float(true_m)

    def kernel(p_ref, w_ref, g_ref, b_ref, o_ref):
        acc = jnp.dot(p_ref[...], w_ref[...], preferred_element_type=jnp.float32)
        rows = lax.broadcasted_iota(jnp.int32, (acc.shape[0], 1), 0)
        valid = rows < true_m                              # mask padded rows
        mean = jnp.sum(jnp.where(valid, acc, 0.0), axis=0, keepdims=True) * inv_n
        d = jnp.where(valid, acc - mean, 0.0)
        var = jnp.sum(d * d, axis=0, keepdims=True) * inv_n
        scale = g_ref[...] * lax.rsqrt(var + BN_EPS)       # EUP
        shift = b_ref[...] - mean * scale
        y = jnp.maximum(acc * scale + shift, 0.0)
        o_ref[...] = y[:, :o_ref.shape[1]].astype(o_ref.dtype)

    return kernel


def _make_stats_kernel(true_m, tm, tiles_per_group, write_conv):
    """Pass 1: conv tile on the MXU + per-group shifted BN partial sums.

    Per group g the (8, c_pad) output block carries
      row 0: mu_g  (per-channel mean of the group's first tile)
      row 1: s1_g = sum over the group's valid rows of (x - mu_g)
      row 2: s2_g = sum over the group's valid rows of (x - mu_g)^2
    Padded rows are masked out, so the wrapper-side Chan merge is exact."""

    def kernel(p_ref, w_ref, stats_ref, *rest):
        g = pl.program_id(0)
        i = pl.program_id(1)
        acc = jnp.dot(p_ref[...], w_ref[...], preferred_element_type=jnp.float32)

        row0 = (g * tiles_per_group + i) * tm
        rows = lax.broadcasted_iota(jnp.int32, (acc.shape[0], 1), 0) + row0
        valid = rows < true_m

        @pl.when(i == 0)
        def _init():
            n0 = jnp.maximum(jnp.minimum(true_m - row0, tm), 1).astype(jnp.float32)
            stats_ref[...] = jnp.zeros_like(stats_ref)
            stats_ref[0:1, :] = (
                jnp.sum(jnp.where(valid, acc, 0.0), axis=0, keepdims=True) / n0)

        d = jnp.where(valid, acc - stats_ref[0:1, :], 0.0)
        # TODO(synk): if pass 1 ever becomes VALU-bound (post im2col fix), move
        # these column reductions onto the MXU as ones(1, tm) @ d.
        stats_ref[1:2, :] += jnp.sum(d, axis=0, keepdims=True)
        stats_ref[2:3, :] += jnp.sum(d * d, axis=0, keepdims=True)

        if write_conv:
            conv_ref = rest[0]
            conv_ref[...] = acc[:, :conv_ref.shape[1]].astype(conv_ref.dtype)

    return kernel


def _apply_recompute_kernel(p_ref, w_ref, scale_ref, shift_ref, o_ref):
    """Pass 2 (k_pad <= c_pad): recompute the conv tile, fused affine + ReLU."""
    acc = jnp.dot(p_ref[...], w_ref[...], preferred_element_type=jnp.float32)
    y = jnp.maximum(acc * scale_ref[...] + shift_ref[...], 0.0)
    o_ref[...] = y[:, :o_ref.shape[1]].astype(o_ref.dtype)


def _apply_affine_kernel(conv_ref, scale_ref, shift_ref, o_ref):
    """Pass 2 (k_pad > c_pad): pure elementwise affine + ReLU over the bf16
    conv intermediate (no second patches read, no second MXU sweep)."""
    acc = conv_ref[...].astype(jnp.float32)
    y = jnp.maximum(acc * scale_ref[...] + shift_ref[...], 0.0)
    o_ref[...] = y.astype(o_ref.dtype)


# --------------------------------------------------------------------------
# Wrapper
# --------------------------------------------------------------------------
def cnn_cell_forward(x_nchw, conv_w, conv_b, bn_gamma, bn_beta, *,
                     tile_m=None, channels_last_out=False, out_dtype=None):
    """CNNCell forward: Conv2d(3x3, VALID) -> BatchNorm2d (training-mode batch
    stats) -> ReLU.

    x_nchw: (N, Cin, H, W); conv_w: (Cout, Cin, 3, 3); conv_b/bn_*: (Cout,).
    Returns NCHW (module parity) or NHWC with channels_last_out=True.  Pass
    out_dtype=jnp.bfloat16 to halve the output writeback."""
    # A per-channel constant before training-mode BN is exactly cancelled by
    # the mean subtraction, so the conv bias never needs to be added.
    del conv_b

    N, Cin, H, W = x_nchw.shape
    Cout = conv_w.shape[0]
    Ho, Wo = H - 2, W - 2
    M, K = N * Ho * Wo, 9 * Cin
    out_dtype = x_nchw.dtype if out_dtype is None else jnp.dtype(out_dtype)
    out_bytes = jnp.dtype(out_dtype).itemsize

    c_pad = _round_up(Cout, LANES)
    k_pad = _round_up(K, LANES)
    # Small Cout: store only the real channels (16x fewer HBM bytes at Cout=8)
    # instead of a lane-dense 128-padded slab the wrapper would slice anyway.
    store_cols = Cout if Cout <= 64 else c_pad
    # Recompute-vs-store gate: re-reading patches (k_pad bf16/row) vs writing
    # and re-reading a bf16 conv intermediate (store_cols bf16/row).
    store_conv = k_pad > c_pad

    vmem_cap, vmem_limit = _vmem_info()
    tm = tile_m if tile_m is not None else _pick_tile_m(
        k_pad, store_cols, out_bytes, store_conv, vmem_cap, vmem_limit)
    tm = _round_up(max(int(tm), 8), 8)

    # ---- glue: im2col (cols ordered (ky, kx, cin)), bf16 ----
    # TODO(synk): replace with halo-tiled in-kernel im2col (see header note).
    x_nhwc = jnp.transpose(x_nchw, (0, 2, 3, 1)).astype(jnp.bfloat16)
    cols = [x_nhwc[:, ky:ky + Ho, kx:kx + Wo, :]
            for ky in range(3) for kx in range(3)]
    patches = jnp.concatenate(cols, axis=-1).reshape(M, K)        # bf16 (M, K)

    w_mat = jnp.transpose(conv_w, (2, 3, 1, 0)).reshape(K, Cout)
    w_mat = jnp.pad(w_mat, ((0, k_pad - K), (0, c_pad - Cout))).astype(jnp.bfloat16)
    # Padded gamma lanes are 0 so dead lanes can never produce rsqrt(eps) junk.
    gamma = jnp.pad(bn_gamma.astype(jnp.float32), (0, c_pad - Cout)).reshape(1, c_pad)
    beta = jnp.pad(bn_beta.astype(jnp.float32), (0, c_pad - Cout)).reshape(1, c_pad)

    mxu_flops_per_row = 2 * k_pad * c_pad
    BF16, F32 = 2, 4

    if M <= tm:
        # ---- small-instance fast path: one call, one grid step ----
        m_pad = _round_up(M, 8)
        patches_p = jnp.pad(patches, ((0, m_pad - M), (0, k_pad - K)))
        out_flat = pl.pallas_call(
            _make_fused_kernel(M),
            out_shape=jax.ShapeDtypeStruct((m_pad, store_cols), out_dtype),
            grid_spec=pltpu.PrefetchScalarGridSpec(
                num_scalar_prefetch=0,
                grid=(1,),
                in_specs=[
                    pl.BlockSpec((m_pad, k_pad), lambda i: (0, 0)),
                    pl.BlockSpec((k_pad, c_pad), lambda i: (0, 0)),
                    pl.BlockSpec((1, c_pad), lambda i: (0, 0)),
                    pl.BlockSpec((1, c_pad), lambda i: (0, 0)),
                ],
                out_specs=pl.BlockSpec((m_pad, store_cols), lambda i: (0, 0))),
            compiler_params=pltpu.CompilerParams(
                dimension_semantics=("arbitrary",),
                vmem_limit_bytes=vmem_limit),
            cost_estimate=pl.CostEstimate(
                flops=int(m_pad * (mxu_flops_per_row + 8 * c_pad)),
                transcendentals=int(c_pad),
                bytes_accessed=int(m_pad * k_pad * BF16 + k_pad * c_pad * BF16
                                   + 2 * c_pad * F32
                                   + m_pad * store_cols * out_bytes)),
        )(patches_p, w_mat, gamma, beta)
    else:
        num_tiles = _cdiv(M, tm)
        tpg = _cdiv(num_tiles, STAT_GROUPS)
        total_tiles = STAT_GROUPS * tpg
        m_pad = total_tiles * tm
        patches_p = jnp.pad(patches, ((0, m_pad - M), (0, k_pad - K)))

        # ---- pass 1: conv + per-group shifted BN partial sums ----
        stats_sds = jax.ShapeDtypeStruct((STAT_GROUPS * 8, c_pad), jnp.float32)
        stats_spec = pl.BlockSpec((8, c_pad), lambda g, i: (g, 0))
        if store_conv:
            out_shape = (stats_sds,
                         jax.ShapeDtypeStruct((m_pad, store_cols), jnp.bfloat16))
            out_specs = (stats_spec,
                         pl.BlockSpec((tm, store_cols),
                                      lambda g, i: (g * tpg + i, 0)))
        else:
            out_shape = stats_sds
            out_specs = stats_spec

        res = pl.pallas_call(
            _make_stats_kernel(M, tm, tpg, store_conv),
            out_shape=out_shape,
            grid_spec=pltpu.PrefetchScalarGridSpec(
                num_scalar_prefetch=0,
                grid=(STAT_GROUPS, tpg),
                in_specs=[
                    pl.BlockSpec((tm, k_pad), lambda g, i: (g * tpg + i, 0)),
                    pl.BlockSpec((k_pad, c_pad), lambda g, i: (0, 0)),
                ],
                out_specs=out_specs),
            compiler_params=pltpu.CompilerParams(
                # group axis parallel (v7x megacore); tile axis carries the
                # per-group accumulator -> arbitrary.
                dimension_semantics=("parallel", "arbitrary"),
                vmem_limit_bytes=vmem_limit),
            cost_estimate=pl.CostEstimate(
                flops=int(m_pad * (mxu_flops_per_row + 6 * c_pad)),
                transcendentals=0,
                bytes_accessed=int(
                    m_pad * k_pad * BF16 + k_pad * c_pad * BF16
                    + STAT_GROUPS * 8 * c_pad * F32
                    + (m_pad * store_cols * BF16 if store_conv else 0))),
        )(patches_p, w_mat)
        if store_conv:
            stats_out, conv_bf16 = res
        else:
            stats_out = res

        # ---- finalize BN: Chan-style merge of the per-group shifted sums ----
        st = stats_out.reshape(STAT_GROUPS, 8, c_pad)
        mu, s1, s2 = st[:, 0, :], st[:, 1, :], st[:, 2, :]
        counts = [float(min(max(M - g * tpg * tm, 0), tpg * tm))
                  for g in range(STAT_GROUPS)]
        cnt = jnp.asarray(counts, dtype=jnp.float32).reshape(STAT_GROUPS, 1)
        cnt_safe = jnp.maximum(cnt, 1.0)
        m_g = mu + s1 / cnt_safe
        m2_g = s2 - (s1 * s1) / cnt_safe
        mean = jnp.sum(cnt * m_g, axis=0, keepdims=True) * (1.0 / M)
        m2 = jnp.sum(m2_g + cnt * (m_g - mean) ** 2, axis=0, keepdims=True)
        var = jnp.maximum(m2 * (1.0 / M), 0.0)     # biased, as in BN training
        scale = gamma * lax.rsqrt(var + BN_EPS)
        shift = beta - mean * scale

        # ---- pass 2: affine + ReLU ----
        if store_conv:
            out_flat = pl.pallas_call(
                _apply_affine_kernel,
                out_shape=jax.ShapeDtypeStruct((m_pad, store_cols), out_dtype),
                grid_spec=pltpu.PrefetchScalarGridSpec(
                    num_scalar_prefetch=0,
                    grid=(total_tiles,),
                    in_specs=[
                        pl.BlockSpec((tm, store_cols), lambda i: (i, 0)),
                        pl.BlockSpec((1, store_cols), lambda i: (0, 0)),
                        pl.BlockSpec((1, store_cols), lambda i: (0, 0)),
                    ],
                    out_specs=pl.BlockSpec((tm, store_cols), lambda i: (i, 0))),
                compiler_params=pltpu.CompilerParams(
                    dimension_semantics=("parallel",),
                    vmem_limit_bytes=vmem_limit),
                cost_estimate=pl.CostEstimate(
                    flops=int(3 * m_pad * store_cols), transcendentals=0,
                    bytes_accessed=int(m_pad * store_cols * (BF16 + out_bytes)
                                       + 2 * store_cols * F32)),
            )(conv_bf16, scale[:, :store_cols], shift[:, :store_cols])
        else:
            out_flat = pl.pallas_call(
                _apply_recompute_kernel,
                out_shape=jax.ShapeDtypeStruct((m_pad, store_cols), out_dtype),
                grid_spec=pltpu.PrefetchScalarGridSpec(
                    num_scalar_prefetch=0,
                    grid=(total_tiles,),
                    in_specs=[
                        pl.BlockSpec((tm, k_pad), lambda i: (i, 0)),
                        pl.BlockSpec((k_pad, c_pad), lambda i: (0, 0)),
                        pl.BlockSpec((1, c_pad), lambda i: (0, 0)),
                        pl.BlockSpec((1, c_pad), lambda i: (0, 0)),
                    ],
                    out_specs=pl.BlockSpec((tm, store_cols), lambda i: (i, 0))),
                compiler_params=pltpu.CompilerParams(
                    dimension_semantics=("parallel",),
                    vmem_limit_bytes=vmem_limit),
                cost_estimate=pl.CostEstimate(
                    flops=int(m_pad * (mxu_flops_per_row + 3 * c_pad)),
                    transcendentals=0,
                    bytes_accessed=int(m_pad * k_pad * BF16 + k_pad * c_pad * BF16
                                       + 2 * c_pad * F32
                                       + m_pad * store_cols * out_bytes)),
            )(patches_p, w_mat, scale, shift)

    out_nhwc = out_flat[:M, :Cout].reshape(N, Ho, Wo, Cout)
    if channels_last_out:
        return out_nhwc
    return jnp.transpose(out_nhwc, (0, 3, 1, 2))   # NCHW for module parity


# --------------------------------------------------------------------------
# Reference + self-test
# --------------------------------------------------------------------------
def _reference(x_nchw, conv_w, conv_b, bn_gamma, bn_beta):
    # Matches the kernel numerics (bf16 conv inputs, f32 accumulation, f32
    # training-mode BN with biased variance, ReLU).  The conv bias is kept to
    # demonstrate that dropping it inside the kernel is exact.
    conv = lax.conv_general_dilated(
        x_nchw.astype(jnp.bfloat16), conv_w.astype(jnp.bfloat16),
        window_strides=(1, 1), padding="VALID",
        dimension_numbers=("NCHW", "OIHW", "NCHW"),
        preferred_element_type=jnp.float32)
    conv = conv + conv_b[None, :, None, None]
    mean = jnp.mean(conv, axis=(0, 2, 3), keepdims=True)
    var = jnp.mean((conv - mean) ** 2, axis=(0, 2, 3), keepdims=True)
    y = (conv - mean) * lax.rsqrt(var + BN_EPS)
    y = y * bn_gamma[None, :, None, None] + bn_beta[None, :, None, None]
    return jnp.maximum(y, 0.0)


def _make_params(key, cin, cout):
    kw, kb, kg, kbeta = jax.random.split(key, 4)
    fan_in = cin * 9
    bound = 1.0 / (fan_in ** 0.5)
    w = jax.random.uniform(kw, (cout, cin, 3, 3), jnp.float32, -bound, bound)
    b = jax.random.uniform(kb, (cout,), jnp.float32, -bound, bound)
    gamma = 1.0 + 0.1 * jax.random.normal(kg, (cout,), jnp.float32)
    beta = 0.1 * jax.random.normal(kbeta, (cout,), jnp.float32)
    return w, b, gamma, beta


if __name__ == "__main__":
    key = jax.random.PRNGKey(0)
    kx1, kp1, kx2, kp2 = jax.random.split(key, 4)

    # CNNCell(input_channels=4, output_channels=8) at small shapes.
    N, Cin, H, W, Cout = 2, 4, 16, 16, 8
    x = jax.random.normal(kx1, (N, Cin, H, W), dtype=jnp.float32)
    w, b, gamma, beta = _make_params(kp1, Cin, Cout)
    ref = _reference(x, w, b, gamma, beta)

    # Path 1: single fused call (all 392 rows fit in one tile).
    out = jax.block_until_ready(cnn_cell_forward(x, w, b, gamma, beta))
    assert out.shape == (N, Cout, H - 2, W - 2), out.shape
    err = float(jnp.max(jnp.abs(out - ref)))
    assert jnp.allclose(out, ref, rtol=2e-3, atol=2e-3), err

    # Path 2: forced multi-tile -> megacore-grouped stats pass + conv-recompute
    # apply pass (k_pad == c_pad == 128).
    out_mt = jax.block_until_ready(
        cnn_cell_forward(x, w, b, gamma, beta, tile_m=128))
    err_mt = float(jnp.max(jnp.abs(out_mt - ref)))
    assert jnp.allclose(out_mt, ref, rtol=2e-3, atol=2e-3), err_mt

    # Path 3: Cin=16 -> k_pad(256) > c_pad(128): the stats pass also writes a
    # bf16 conv intermediate and the apply pass is pure elementwise affine+ReLU.
    Cin2 = 16
    x2 = jax.random.normal(kx2, (N, Cin2, H, W), dtype=jnp.float32)
    w2, b2, gamma2, beta2 = _make_params(kp2, Cin2, Cout)
    ref2 = _reference(x2, w2, b2, gamma2, beta2)
    out2 = jax.block_until_ready(
        cnn_cell_forward(x2, w2, b2, gamma2, beta2, tile_m=128))
    err2 = float(jnp.max(jnp.abs(out2 - ref2)))
    assert jnp.allclose(out2, ref2, rtol=5e-2, atol=5e-2), err2

    print("KERNEL_OK")
</pallas_src>

<mosaic_0001>
module attributes {stable_mosaic.version = 11 : i64} {
  func.func @kernel(%arg0: i32, %arg1: memref<392x128xbf16, #tpu.memory_space<vmem>>, %arg2: memref<128x128xbf16, #tpu.memory_space<vmem>>, %arg3: memref<1x128xf32, #tpu.memory_space<vmem>>, %arg4: memref<1x128xf32, #tpu.memory_space<vmem>>, %arg5: memref<392x8xf32, #tpu.memory_space<vmem>>) attributes {dimension_semantics = [#tpu.dimension_semantics<arbitrary>], iteration_bounds = array<i64: 1>, scalar_prefetch = 0 : i64, scratch_operands = 0 : i64, tpu.core_type = #tpu.core_type<tc>, window_params = [{pipeline_mode = #tpu.pipeline_mode<synchronous>, transform_indices = @transform_0, window_bounds = array<i64: 392, 128>}, {pipeline_mode = #tpu.pipeline_mode<synchronous>, transform_indices = @transform_1, window_bounds = array<i64: 128, 128>}, {pipeline_mode = #tpu.pipeline_mode<synchronous>, transform_indices = @transform_2, window_bounds = array<i64: 1, 128>}, {pipeline_mode = #tpu.pipeline_mode<synchronous>, transform_indices = @transform_3, window_bounds = array<i64: 1, 128>}, {pipeline_mode = #tpu.pipeline_mode<synchronous>, transform_indices = @transform_4, window_bounds = array<i64: 392, 8>}]} {
    %c0 = arith.constant 0 : index
    %c0_0 = arith.constant 0 : index
    %0 = vector.load %arg1[%c0, %c0_0] : memref<392x128xbf16, #tpu.memory_space<vmem>>, vector<392x128xbf16>
    %c0_1 = arith.constant 0 : index
    %c0_2 = arith.constant 0 : index
    %1 = vector.load %arg2[%c0_1, %c0_2] : memref<128x128xbf16, #tpu.memory_space<vmem>>, vector<128x128xbf16>
    %cst = arith.constant dense<0.000000e+00> : vector<392x128xf32>
    %2 = tpu.matmul %0, %1, %cst {dimension_numbers = #tpu.dot_dimension_numbers<[1], [0], [0], [1], [0, 0, 1, 1], [], []>} : vector<392x128xbf16>, vector<128x128xbf16>, vector<392x128xf32> -> vector<392x128xf32>
    %3 = tpu.iota {dimensions = array<i32: 0>} : vector<392x1xi32>
    %c392_i32 = arith.constant 392 : i32
    %4 = vector.broadcast %c392_i32 : i32 to vector<392x1xi32>
    %5 = arith.cmpi slt, %3, %4 : vector<392x1xi32>
    %cst_3 = arith.constant 0.000000e+00 : f32
    %6 = vector.shape_cast %5 : vector<392x1xi1> to vector<392x1xi1>
    %7 = vector.broadcast %6 : vector<392x1xi1> to vector<392x128xi1>
    %8 = vector.broadcast %cst_3 : f32 to vector<392x128xf32>
    %9 = arith.select %7, %2, %8 : vector<392x128xi1>, vector<392x128xf32>
    %cst_4 = arith.constant dense<0.000000e+00> : vector<128xf32>
    %10 = vector.multi_reduction <add>, %9, %cst_4 [0] : vector<392x128xf32> to vector<128xf32>
    %11 = vector.shape_cast %10 : vector<128xf32> to vector<1x128xf32>
    %cst_5 = arith.constant 0.00255102036 : f32
    %12 = vector.broadcast %cst_5 : f32 to vector<1x128xf32>
    %13 = arith.mulf %11, %12 : vector<1x128xf32>
    %14 = vector.broadcast %13 : vector<1x128xf32> to vector<392x128xf32>
    %15 = arith.subf %2, %14 : vector<392x128xf32>
    %cst_6 = arith.constant 0.000000e+00 : f32
    %16 = vector.shape_cast %5 : vector<392x1xi1> to vector<392x1xi1>
    %17 = vector.broadcast %16 : vector<392x1xi1> to vector<392x128xi1>
    %18 = vector.broadcast %cst_6 : f32 to vector<392x128xf32>
    %19 = arith.select %17, %15, %18 : vector<392x128xi1>, vector<392x128xf32>
    %20 = arith.mulf %19, %19 : vector<392x128xf32>
    %cst_7 = arith.constant dense<0.000000e+00> : vector<128xf32>
    %21 = vector.multi_reduction <add>, %20, %cst_7 [0] : vector<392x128xf32> to vector<128xf32>
    %22 = vector.shape_cast %21 : vector<128xf32> to vector<1x128xf32>
    %cst_8 = arith.constant 0.00255102036 : f32
    %23 = vector.broadcast %cst_8 : f32 to vector<1x128xf32>
    %24 = arith.mulf %22, %23 : vector<1x128xf32>
    %c0_9 = arith.constant 0 : index
    %c0_10 = arith.constant 0 : index
    %25 = vector.load %arg3[%c0_9, %c0_10] : memref<1x128xf32, #tpu.memory_space<vmem>>, vector<1x128xf32>
    %cst_11 = arith.constant 9.99999974E-6 : f32
    %26 = vector.broadcast %cst_11 : f32 to vector<1x128xf32>
    %27 = arith.addf %24, %26 : vector<1x128xf32>
    %28 = math.rsqrt %27 : vector<1x128xf32>
    %29 = arith.mulf %25, %28 : vector<1x128xf32>
    %c0_12 = arith.constant 0 : index
    %c0_13 = arith.constant 0 : index
    %30 = vector.load %arg4[%c0_12, %c0_13] : memref<1x128xf32, #tpu.memory_space<vmem>>, vector<1x128xf32>
    %31 = arith.mulf %13, %29 : vector<1x128xf32>
    %32 = arith.subf %30, %31 : vector<1x128xf32>
    %33 = vector.broadcast %29 : vector<1x128xf32> to vector<392x128xf32>
    %34 = arith.mulf %2, %33 : vector<392x128xf32>
    %35 = vector.broadcast %32 : vector<1x128xf32> to vector<392x128xf32>
    %36 = arith.addf %34, %35 : vector<392x128xf32>
    %cst_14 = arith.constant 0.000000e+00 : f32
    %37 = vector.broadcast %cst_14 : f32 to vector<392x128xf32>
    %38 = arith.maximumf %36, %37 : vector<392x128xf32>
    %39 = vector.extract_strided_slice %38 {offsets = [0, 0], sizes = [392, 8], strides = [1, 1]} : vector<392x128xf32> to vector<392x8xf32>
    %c0_15 = arith.constant 0 : index
    %c0_16 = arith.constant 0 : index
    %40 = vector.load %arg5[%c0_15, %c0_16] : memref<392x8xf32, #tpu.memory_space<vmem>>, vector<392x8xf32>
    tpu.vector_store %arg5[%c0_15, %c0_16], %39 {strides = array<i32>} : memref<392x8xf32, #tpu.memory_space<vmem>>, vector<392x8xf32>,
    return
  }
  func.func @transform_0(%arg0: i32) -> (i32, i32) {
    %c0_i32 = arith.constant 0 : i32
    %c0_i32_0 = arith.constant 0 : i32
    %c0_i32_1 = arith.constant 0 : i32
    return %c0_i32, %c0_i32_0 : i32, i32
  }
  func.func @transform_1(%arg0: i32) -> (i32, i32) {
    %c0_i32 = arith.constant 0 : i32
    %c0_i32_0 = arith.constant 0 : i32
    %c0_i32_1 = arith.constant 0 : i32
    return %c0_i32, %c0_i32_0 : i32, i32
  }
  func.func @transform_2(%arg0: i32) -> (i32, i32) {
    %c0_i32 = arith.constant 0 : i32
    %c0_i32_0 = arith.constant 0 : i32
    %c0_i32_1 = arith.constant 0 : i32
    return %c0_i32, %c0_i32_0 : i32, i32
  }
  func.func @transform_3(%arg0: i32) -> (i32, i32) {
    %c0_i32 = arith.constant 0 : i32
    %c0_i32_0 = arith.constant 0 : i32
    %c0_i32_1 = arith.constant 0 : i32
    return %c0_i32, %c0_i32_0 : i32, i32
  }
  func.func @transform_4(%arg0: i32) -> (i32, i32) {
    %c0_i32 = arith.constant 0 : i32
    %c0_i32_0 = arith.constant 0 : i32
    %c0_i32_1 = arith.constant 0 : i32
    return %c0_i32, %c0_i32_0 : i32, i32
  }
}

</mosaic_0001>

<llo_original>
// kernel: tpu_custom_call.1
$region0: #{tpu_custom_call.1}
  #allocation0 [shape = 'u32[]', space=smem, size = 0x4, offset = 0x4, fixed_abs, tag = 'smem constant byte address 0x4 - core index']
  #allocation1 [shape = 'u32[72,128]{1,0:T(1,128)}', space=vmem, size = 0x9000, scoped, tag = 'internal scratch']
  %s0 = inlined_call_operand.hbm [shape: bf16[392,128], index: 0, kind: input, shape index: {}]
  %s1 = inlined_call_operand.hbm [shape: bf16[128,128], index: 1, kind: input, shape index: {}]
  %s2 = inlined_call_operand.vmem [shape: f32[1,128], index: 2, kind: input, shape index: {}]
  %s3 = inlined_call_operand.vmem [shape: f32[1,128], index: 3, kind: input, shape index: {}]
  %s4 = inlined_call_operand.vmem [shape: f32[392,8], index: 4, kind: output, shape index: {}]
  %s5 = sld [smem:[#allocation0]]
  $region34: #{tpu_custom_call.1} parent=0
    _
  %s7 = ssub.s32 1, %s5
  %s8 = scalar_select 0, %s7, %s5
  $region1: #{tpu_custom_call.1} parent=0
    #allocation2 [shape = 'u8[100352]{0}', space=vmem, size = 0x18800, scoped, tag = 'input window, operand 0, single buffered']
    #allocation3 [shape = 's32[1]{0}', space=sflag, size = 0x4, scoped, tag = 'scoped memory for tpu_custom_call.1']
    #allocation4 [shape = 'u8[32768]{0}', space=vmem, size = 0x8000, scoped, tag = 'input window, operand 1, single buffered']
    #allocation5 [shape = 's32[1]{0}', space=sflag, size = 0x4, scoped, tag = 'scoped memory for tpu_custom_call.1']
    %9 = vsyncpa [#allocation3], 0
    %10 = vsyncpa [#allocation5], 0
    // Predicated region
    $region2: #{tpu_custom_call.1} parent=1 // pred_check
      _
    $region3: #{tpu_custom_call.1} parent=1 // pred_check_branch
      %12 = sbr.rel (0) target = $region5
    $region4: #{tpu_custom_call.1} parent=1 // pred_region
      %14 = vsyncadd [#allocation3], 0
      %s15 = sshll.u32 %s0, 4
      %s16 = int_to_ptr.hbm [resolvable:$true] %s15
      %s17 = sshll.u32 [#allocation2], 4
      %s18 = int_to_ptr.vmem [resolvable:$true] %s17
      %23 = dma.hbm_to_vmem [thread:$0]  %s16, 3136, %s18, [#allocation3], 64, 64, 4
    $region5: #{tpu_custom_call.1} parent=1 // pred_fallthru
      _
    // Predicated region
    $region6: #{tpu_custom_call.1} parent=1 // pred_check
      _
    $region7: #{tpu_custom_call.1} parent=1 // pred_check_branch
      %25 = sbr.rel (0) target = $region9
    $region8: #{tpu_custom_call.1} parent=1 // pred_region
      %27 = vsyncadd [#allocation5], 0
      %s28 = sshll.u32 %s1, 4
      %s29 = int_to_ptr.hbm [resolvable:$true] %s28
      %s30 = sshll.u32 [#allocation4], 4
      %s31 = int_to_ptr.vmem [resolvable:$true] %s30
      %36 = dma.hbm_to_vmem [thread:$0]  %s29, 1024, %s31, [#allocation5], 64, 64, 4
    $region9: #{tpu_custom_call.1} parent=1 // pred_fallthru
      _
    // Predicated region
    $region10: #{tpu_custom_call.1} parent=1 // pred_check
      _
    $region11: #{tpu_custom_call.1} parent=1 // pred_check_branch
      %38 = sbr.rel (0) target = $region13
    $region12: #{tpu_custom_call.1} parent=1 // pred_region
      _
    $region13: #{tpu_custom_call.1} parent=1 // pred_fallthru
      _
    // Predicated region
    $region14: #{tpu_custom_call.1} parent=1 // pred_check
      _
    $region15: #{tpu_custom_call.1} parent=1 // pred_check_branch
      %40 = sbr.rel (0) target = $region17
    $region16: #{tpu_custom_call.1} parent=1 // pred_region
      _
    $region17: #{tpu_custom_call.1} parent=1 // pred_fallthru
      _
    // Predicated region
    $region18: #{tpu_custom_call.1} parent=1 // pred_check
      _
    $region19: #{tpu_custom_call.1} parent=1 // pred_check_branch
      %42 = sbr.rel (0) target = $region21
    $region20: #{tpu_custom_call.1} parent=1 // pred_region
      %44 = dma.done [#allocation3], 3136
    $region21: #{tpu_custom_call.1} parent=1 // pred_fallthru
      _
    // Predicated region
    $region22: #{tpu_custom_call.1} parent=1 // pred_check
      _
    $region23: #{tpu_custom_call.1} parent=1 // pred_check_branch
      %46 = sbr.rel (0) target = $region25
    $region24: #{tpu_custom_call.1} parent=1 // pred_region
      %48 = dma.done [#allocation5], 1024
    $region25: #{tpu_custom_call.1} parent=1 // pred_fallthru
      _
    %v49 = vld [vmem:[#allocation2] sm:$0xf]
    %v50 = vld [vmem:[#allocation2 + $0x4] sm:$0xf]
    %v51 = vld [vmem:[#allocation2 + $0x8] sm:$0xf]
    %v52 = vld [vmem:[#allocation2 + $0xc] sm:$0xf]
    %v53 = vld [vmem:[#allocation2 + $0x10] sm:$0xf]
    %v54 = vld [vmem:[#allocation2 + $0x14] sm:$0xf]
    %v55 = vld [vmem:[#allocation2 + $0x18] sm:$0xf]
    %v56 = vld [vmem:[#allocation2 + $0x1c] sm:$0xf]
    %v57 = vld [vmem:[#allocation2 + $0x20] sm:$0xf]
    %v58 = vld [vmem:[#allocation2 + $0x24] sm:$0xf]
    %v59 = vld [vmem:[#allocation2 + $0x28] sm:$0xf]
    %v60 = vld [vmem:[#allocation2 + $0x2c] sm:$0xf]
    %v61 = vld [vmem:[#allocation2 + $0x30] sm:$0xf]
    %v62 = vld [vmem:[#allocation2 + $0x34] sm:$0xf]
    %v63 = vld [vmem:[#allocation2 + $0x38] sm:$0xf]
    %v64 = vld [vmem:[#allocation2 + $0x3c] sm:$0xf]
    %v65 = vld [vmem:[#allocation2 + $0x40] sm:$0xf]
    %v66 = vld [vmem:[#allocation2 + $0x44] sm:$0xf]
    %v67 = vld [vmem:[#allocation2 + $0x48] sm:$0xf]
    %v68 = vld [vmem:[#allocation2 + $0x4c] sm:$0xf]
    %v69 = vld [vmem:[#allocation2 + $0x50] sm:$0xf]
    %v70 = vld [vmem:[#allocation2 + $0x54] sm:$0xf]
    %v71 = vld [vmem:[#allocation2 + $0x58] sm:$0xf]
    %v72 = vld [vmem:[#allocation2 + $0x5c] sm:$0xf]
    %v73 = vld [vmem:[#allocation2 + $0x60] sm:$0xf]
    %v74 = vld [vmem:[#allocation2 + $0x64] sm:$0xf]
    %v75 = vld [vmem:[#allocation2 + $0x68] sm:$0xf]
    %v76 = vld [vmem:[#allocation2 + $0x6c] sm:$0xf]
    %v77 = vld [vmem:[#allocation2 + $0x70] sm:$0xf]
    %v78 = vld [vmem:[#allocation2 + $0x74] sm:$0xf]
    %v79 = vld [vmem:[#allocation2 + $0x78] sm:$0xf]
    %v80 = vld [vmem:[#allocation2 + $0x7c] sm:$0xf]
    %v81 = vld [vmem:[#allocation2 + $0x80] sm:$0xf]
    %v82 = vld [vmem:[#allocation2 + $0x84] sm:$0xf]
    %v83 = vld [vmem:[#allocation2 + $0x88] sm:$0xf]
    %v84 = vld [vmem:[#allocation2 + $0x8c] sm:$0xf]
    %v85 = vld [vmem:[#allocation2 + $0x90] sm:$0xf]
    %v86 = vld [vmem:[#allocation2 + $0x94] sm:$0xf]
    %v87 = vld [vmem:[#allocation2 + $0x98] sm:$0xf]
    %v88 = vld [vmem:[#allocation2 + $0x9c] sm:$0xf]
    %v89 = vld [vmem:[#allocation2 + $0xa0] sm:$0xf]
    %v90 = vld [vmem:[#allocation2 + $0xa4] sm:$0xf]
    %v91 = vld [vmem:[#allocation2 + $0xa8] sm:$0xf]
    %v92 = vld [vmem:[#allocation2 + $0xac] sm:$0xf]
    %v93 = vld [vmem:[#allocation2 + $0xb0] sm:$0xf]
    %v94 = vld [vmem:[#allocation2 + $0xb4] sm:$0xf]
    %v95 = vld [vmem:[#allocation2 + $0xb8] sm:$0xf]
    %v96 = vld [vmem:[#allocation2 + $0xbc] sm:$0xf]
    %v97 = vld [vmem:[#allocation2 + $0xc0] sm:$0xf]
    %v98 = vld [vmem:[#allocation4] sm:$0xf]
    %v99 = vld [vmem:[#allocation4 + $0x4] sm:$0xf]
    %v100 = vld [vmem:[#allocation4 + $0x8] sm:$0xf]
    %v101 = vld [vmem:[#allocation4 + $0xc] sm:$0xf]
    %v102 = vld [vmem:[#allocation4 + $0x10] sm:$0xf]
    %v103 = vld [vmem:[#allocation4 + $0x14] sm:$0xf]
    %v104 = vld [vmem:[#allocation4 + $0x18] sm:$0xf]
    %v105 = vld [vmem:[#allocation4 + $0x1c] sm:$0xf]
    %v106 = vld [vmem:[#allocation4 + $0x20] sm:$0xf]
    %v107 = vld [vmem:[#allocation4 + $0x24] sm:$0xf]
    %v108 = vld [vmem:[#allocation4 + $0x28] sm:$0xf]
    %v109 = vld [vmem:[#allocation4 + $0x2c] sm:$0xf]
    %v110 = vld [vmem:[#allocation4 + $0x30] sm:$0xf]
    %v111 = vld [vmem:[#allocation4 + $0x34] sm:$0xf]
    %v112 = vld [vmem:[#allocation4 + $0x38] sm:$0xf]
    %v113 = vld [vmem:[#allocation4 + $0x3c] sm:$0xf]
    %v163 = vunpack.c.l.b16 %v49
    %v164 = vunpack.c.l.b16 %v50
    %v165 = vunpack.c.l.b16 %v51
    %v166 = vunpack.c.l.b16 %v52
    %v167 = vunpack.c.l.b16 %v53
    %v168 = vunpack.c.l.b16 %v54
    %v169 = vunpack.c.l.b16 %v55
    %v170 = vunpack.c.l.b16 %v56
    %v171 = vunpack.c.l.b16 %v57
    %v172 = vunpack.c.l.b16 %v58
    %v173 = vunpack.c.l.b16 %v59
    %v174 = vunpack.c.l.b16 %v60
    %v175 = vunpack.c.l.b16 %v61
    %v176 = vunpack.c.l.b16 %v62
    %v177 = vunpack.c.l.b16 %v63
    %v178 = vunpack.c.l.b16 %v64
    %v179 = vunpack.c.l.b16 %v65
    %v180 = vunpack.c.l.b16 %v66
    %v181 = vunpack.c.l.b16 %v67
    %v182 = vunpack.c.l.b16 %v68
    %v183 = vunpack.c.l.b16 %v69
    %v184 = vunpack.c.l.b16 %v70
    %v185 = vunpack.c.l.b16 %v71
    %v186 = vunpack.c.l.b16 %v72
    %v187 = vunpack.c.l.b16 %v73
    %v188 = vunpack.c.l.b16 %v74
    %v189 = vunpack.c.l.b16 %v75
    %v190 = vunpack.c.l.b16 %v76
    %v191 = vunpack.c.l.b16 %v77
    %v192 = vunpack.c.l.b16 %v78
    %v193 = vunpack.c.l.b16 %v79
    %v194 = vunpack.c.l.b16 %v80
    %v195 = vunpack.c.l.b16 %v81
    %v196 = vunpack.c.l.b16 %v82
    %v197 = vunpack.c.l.b16 %v83
    %v198 = vunpack.c.l.b16 %v84
    %v199 = vunpack.c.l.b16 %v85
    %v200 = vunpack.c.l.b16 %v86
    %v201 = vunpack.c.l.b16 %v87
    %v202 = vunpack.c.l.b16 %v88
    %v203 = vunpack.c.l.b16 %v89
    %v204 = vunpack.c.l.b16 %v90
    %v205 = vunpack.c.l.b16 %v91
    %v206 = vunpack.c.l.b16 %v92
    %v207 = vunpack.c.l.b16 %v93
    %v208 = vunpack.c.l.b16 %v94
    %v209 = vunpack.c.l.b16 %v95
    %v210 = vunpack.c.l.b16 %v96
    %v211 = vunpack.c.l.b16 %v97
    %v212 = vpack.c.b16 %v164, %v163
    %v213 = vpack.c.b16 %v166, %v165
    %v214 = vpack.c.b16 %v168, %v167
    %v215 = vpack.c.b16 %v170, %v169
    %v216 = vpack.c.b16 %v172, %v171
    %v217 = vpack.c.b16 %v174, %v173
    %v218 = vpack.c.b16 %v176, %v175
    %v219 = vpack.c.b16 %v178, %v177
    %v220 = vpack.c.b16 %v180, %v179
    %v221 = vpack.c.b16 %v182, %v181
    %v222 = vpack.c.b16 %v184, %v183
    %v223 = vpack.c.b16 %v186, %v185
    %v224 = vpack.c.b16 %v188, %v187
    %v225 = vpack.c.b16 %v190, %v189
    %v226 = vpack.c.b16 %v192, %v191
    %v227 = vpack.c.b16 %v194, %v193
    %v228 = vpack.c.b16 %v196, %v195
    %v229 = vpack.c.b16 %v198, %v197
    %v230 = vpack.c.b16 %v200, %v199
    %v231 = vpack.c.b16 %v202, %v201
    %v232 = vpack.c.b16 %v204, %v203
    %v233 = vpack.c.b16 %v206, %v205
    %v234 = vpack.c.b16 %v208, %v207
    %v235 = vpack.c.b16 %v210, %v209
    %v236 = vpack.c.b16 %v211, %v211
    %v278 = vunpack.c.l.b16 %v98
    %v279 = vunpack.c.l.b16 %v99
    %v280 = vunpack.c.l.b16 %v100
    %v281 = vunpack.c.l.b16 %v101
    %v282 = vunpack.c.l.b16 %v102
    %v283 = vunpack.c.l.b16 %v103
    %v284 = vunpack.c.l.b16 %v104
    %v285 = vunpack.c.l.b16 %v105
    %v286 = vunpack.c.l.b16 %v106
    %v287 = vunpack.c.l.b16 %v107
    %v288 = vunpack.c.l.b16 %v108
    %v289 = vunpack.c.l.b16 %v109
    %v290 = vunpack.c.l.b16 %v110
    %v291 = vunpack.c.l.b16 %v111
    %v292 = vunpack.c.l.b16 %v112
    %v293 = vunpack.c.l.b16 %v113
    %v294 = vpack.c.b16 %v279, %v278
    %v295 = vpack.c.b16 %v281, %v280
    %v296 = vpack.c.b16 %v283, %v282
    %v297 = vpack.c.b16 %v285, %v284
    %v298 = vpack.c.b16 %v287, %v286
    %v299 = vpack.c.b16 %v289, %v288
    %v300 = vpack.c.b16 %v291, %v290
    %v301 = vpack.c.b16 %v293, %v292
    %310 = vmatpush.bf16.msra.mxu0 %v301
    %311 = vmatpush.bf16.msra.mxu0 %v300
    %312 = vmatpush.bf16.msra.mxu0 %v299
    %313 = vmatpush.bf16.msra.mxu0 %v298
    %314 = vmatpush.bf16.msra.mxu0 %v297
    %315 = vmatpush.bf16.msra.mxu0 %v296
    %316 = vmatpush.bf16.msra.mxu0 %v295
    %317 = vmatpush.bf16.msra.mxu0 %v294
    %318 = vmatmul.bf16.gmra.mxu0 %v212
    %v319 = vpop.f32.mrf.mxu0
    %v320 = vadd.f32 0.0, %v319
    %v321 = vpop.f32.mrf.mxu0
    %v322 = vadd.f32 0.0, %v321
    %323 = vmatmul.bf16.gmra.mxu0 %v213
    %v324 = vpop.f32.mrf.mxu0
    %v325 = vadd.f32 0.0, %v324
    %v326 = vpop.f32.mrf.mxu0
    %v327 = vadd.f32 0.0, %v326
    %328 = vmatmul.bf16.gmra.mxu0 %v214
    %v329 = vpop.f32.mrf.mxu0
    %v330 = vadd.f32 0.0, %v329
    %v331 = vpop.f32.mrf.mxu0
    %v332 = vadd.f32 0.0, %v331
    %333 = vmatmul.bf16.gmra.mxu0 %v215
    %v334 = vpop.f32.mrf.mxu0
    %v335 = vadd.f32 0.0, %v334
    %v336 = vpop.f32.mrf.mxu0
    %v337 = vadd.f32 0.0, %v336
    %338 = vmatmul.bf16.gmra.mxu0 %v216
    %v339 = vpop.f32.mrf.mxu0
    %v340 = vadd.f32 0.0, %v339
    %v341 = vpop.f32.mrf.mxu0
    %v342 = vadd.f32 0.0, %v341
    %343 = vmatmul.bf16.gmra.mxu0 %v217
    %v344 = vpop.f32.mrf.mxu0
    %v345 = vadd.f32 0.0, %v344
    %v346 = vpop.f32.mrf.mxu0
    %v347 = vadd.f32 0.0, %v346
    %348 = vmatmul.bf16.gmra.mxu0 %v218
    %v349 = vpop.f32.mrf.mxu0
    %v350 = vadd.f32 0.0, %v349
    %v351 = vpop.f32.mrf.mxu0
    %v352 = vadd.f32 0.0, %v351
    %353 = vmatmul.bf16.gmra.mxu0 %v219
    %v354 = vpop.f32.mrf.mxu0
    %v355 = vadd.f32 0.0, %v354
    %v356 = vpop.f32.mrf.mxu0
    %v357 = vadd.f32 0.0, %v356
    %358 = vmatmul.bf16.gmra.mxu0 %v220
    %v359 = vpop.f32.mrf.mxu0
    %v360 = vadd.f32 0.0, %v359
    %v361 = vpop.f32.mrf.mxu0
    %v362 = vadd.f32 0.0, %v361
    %363 = vmatmul.bf16.gmra.mxu0 %v221
    %v364 = vpop.f32.mrf.mxu0
    %v365 = vadd.f32 0.0, %v364
    %v366 = vpop.f32.mrf.mxu0
    %v367 = vadd.f32 0.0, %v366
    %368 = vmatmul.bf16.gmra.mxu0 %v222
    %v369 = vpop.f32.mrf.mxu0
    %v370 = vadd.f32 0.0, %v369
    %v371 = vpop.f32.mrf.mxu0
    %v372 = vadd.f32 0.0, %v371
    %373 = vmatmul.bf16.gmra.mxu0 %v223
    %v374 = vpop.f32.mrf.mxu0
    %v375 = vadd.f32 0.0, %v374
    %v376 = vpop.f32.mrf.mxu0
    %v377 = vadd.f32 0.0, %v376
    %378 = vmatmul.bf16.gmra.mxu0 %v224
    %v379 = vpop.f32.mrf.mxu0
    %v380 = vadd.f32 0.0, %v379
    %v381 = vpop.f32.mrf.mxu0
    %v382 = vadd.f32 0.0, %v381
    %383 = vmatmul.bf16.gmra.mxu0 %v225
    %v384 = vpop.f32.mrf.mxu0
    %v385 = vadd.f32 0.0, %v384
    %v386 = vpop.f32.mrf.mxu0
    %v387 = vadd.f32 0.0, %v386
    %388 = vmatmul.bf16.gmra.mxu0 %v226
    %v389 = vpop.f32.mrf.mxu0
    %v390 = vadd.f32 0.0, %v389
    %v391 = vpop.f32.mrf.mxu0
    %v392 = vadd.f32 0.0, %v391
    %393 = vmatmul.bf16.gmra.mxu0 %v227
    %v394 = vpop.f32.mrf.mxu0
    %v395 = vadd.f32 0.0, %v394
    %v396 = vpop.f32.mrf.mxu0
    %v397 = vadd.f32 0.0, %v396
    %398 = vmatmul.bf16.gmra.mxu0 %v228
    %v399 = vpop.f32.mrf.mxu0
    %v400 = vadd.f32 0.0, %v399
    %v401 = vpop.f32.mrf.mxu0
    %v402 = vadd.f32 0.0, %v401
    %403 = vmatmul.bf16.gmra.mxu0 %v229
    %v404 = vpop.f32.mrf.mxu0
    %v405 = vadd.f32 0.0, %v404
    %v406 = vpop.f32.mrf.mxu0
    %v407 = vadd.f32 0.0, %v406
    %408 = vmatmul.bf16.gmra.mxu0 %v230
    %v409 = vpop.f32.mrf.mxu0
    %v410 = vadd.f32 0.0, %v409
    %v411 = vpop.f32.mrf.mxu0
    %v412 = vadd.f32 0.0, %v411
    %413 = vmatmul.bf16.gmra.mxu0 %v231
    %v414 = vpop.f32.mrf.mxu0
    %v415 = vadd.f32 0.0, %v414
    %v416 = vpop.f32.mrf.mxu0
    %v417 = vadd.f32 0.0, %v416
    %418 = vmatmul.bf16.gmra.mxu0 %v232
    %v419 = vpop.f32.mrf.mxu0
    %v420 = vadd.f32 0.0, %v419
    %v421 = vpop.f32.mrf.mxu0
    %v422 = vadd.f32 0.0, %v421
    %423 = vmatmul.bf16.gmra.mxu0 %v233
    %v424 = vpop.f32.mrf.mxu0
    %v425 = vadd.f32 0.0, %v424
    %v426 = vpop.f32.mrf.mxu0
    %v427 = vadd.f32 0.0, %v426
    %428 = vmatmul.bf16.gmra.mxu0 %v234
    %v429 = vpop.f32.mrf.mxu0
    %v430 = vadd.f32 0.0, %v429
    %v431 = vpop.f32.mrf.mxu0
    %v432 = vadd.f32 0.0, %v431
    %433 = vmatmul.bf16.gmra.mxu0 %v235
    %v434 = vpop.f32.mrf.mxu0
    %v435 = vadd.f32 0.0, %v434
    %v436 = vpop.f32.mrf.mxu0
    %v437 = vadd.f32 0.0, %v436
    %438 = vmatmul.bf16.gmra.mxu0 %v236
    %v439 = vpop.f32.mrf.mxu0
    %v440 = vadd.f32 0.0, %v439
    %v441 = vpop.f32.mrf.mxu0
    %442 = vdwg.mxu0
    %v443 = vlaneseq
    %v444 = vshrl.u32 %v443, 7
    %v445 = vadd.s32 %v444, 8
    %v446 = vadd.s32 %v444, 16
    %v447 = vadd.s32 %v444, 24
    %v448 = vadd.s32 %v444, 32
    %v449 = vadd.s32 %v444, 40
    %v450 = vadd.s32 %v444, 48
    %v451 = vadd.s32 %v444, 56
    %v452 = vadd.s32 %v444, 64
    %v453 = vadd.s32 %v444, 72
    %v454 = vadd.s32 %v444, 80
    %v455 = vadd.s32 %v444, 88
    %v456 = vadd.s32 %v444, 96
    %v457 = vadd.s32 %v444, 104
    %v458 = vadd.s32 %v444, 112
    %v459 = vadd.s32 %v444, 120
    %v460 = vadd.s32 %v444, 128
    %v461 = vadd.s32 %v444, 136
    %v462 = vadd.s32 %v444, 144
    %v463 = vadd.s32 %v444, 152
    %v464 = vadd.s32 %v444, 160
    %v465 = vadd.s32 %v444, 168
    %v466 = vadd.s32 %v444, 176
    %v467 = vadd.s32 %v444, 184
    %v468 = vadd.s32 %v444, 192
    %v469 = vadd.s32 %v444, 200
    %v470 = vadd.s32 %v444, 208
    %v471 = vadd.s32 %v444, 216
    %v472 = vadd.s32 %v444, 224
    %v473 = vadd.s32 %v444, 232
    %v474 = vadd.s32 %v444, 240
    %v475 = vadd.s32 %v444, 248
    %v476 = vadd.s32 %v444, 256
    %v477 = vadd.s32 %v444, 264
    %v478 = vadd.s32 %v444, 272
    %v479 = vadd.s32 %v444, 280
    %v480 = vadd.s32 %v444, 288
    %v481 = vadd.s32 %v444, 296
    %v482 = vadd.s32 %v444, 304
    %v483 = vadd.s32 %v444, 312
    %v484 = vadd.s32 %v444, 320
    %v485 = vadd.s32 %v444, 328
    %v486 = vadd.s32 %v444, 336
    %v487 = vadd.s32 %v444, 344
    %v488 = vadd.s32 %v444, 352
    %v489 = vadd.s32 %v444, 360
    %v490 = vadd.s32 %v444, 368
    %v491 = vadd.s32 %v444, 376
    %v492 = vadd.s32 %v444, 384
    %vm493 = vcmp.lt.s32.totalorder %v444, 392
    %vm494 = vcmp.lt.s32.totalorder %v445, 392
    %vm495 = vcmp.lt.s32.totalorder %v446, 392
    %vm496 = vcmp.lt.s32.totalorder %v447, 392
    %vm497 = vcmp.lt.s32.totalorder %v448, 392
    %vm498 = vcmp.lt.s32.totalorder %v449, 392
    %vm499 = vcmp.lt.s32.totalorder %v450, 392
    %vm500 = vcmp.lt.s32.totalorder %v451, 392
    %vm501 = vcmp.lt.s32.totalorder %v452, 392
    %vm502 = vcmp.lt.s32.totalorder %v453, 392
    %vm503 = vcmp.lt.s32.totalorder %v454, 392
    %vm504 = vcmp.lt.s32.totalorder %v455, 392
    %vm505 = vcmp.lt.s32.totalorder %v456, 392
    %vm506 = vcmp.lt.s32.totalorder %v457, 392
    %vm507 = vcmp.lt.s32.totalorder %v458, 392
    %vm508 = vcmp.lt.s32.totalorder %v459, 392
    %vm509 = vcmp.lt.s32.totalorder %v460, 392
    %vm510 = vcmp.lt.s32.totalorder %v461, 392
    %vm511 = vcmp.lt.s32.totalorder %v462, 392
    %vm512 = vcmp.lt.s32.totalorder %v463, 392
    %vm513 = vcmp.lt.s32.totalorder %v464, 392
    %vm514 = vcmp.lt.s32.totalorder %v465, 392
    %vm515 = vcmp.lt.s32.totalorder %v466, 392
    %vm516 = vcmp.lt.s32.totalorder %v467, 392
    %vm517 = vcmp.lt.s32.totalorder %v468, 392
    %vm518 = vcmp.lt.s32.totalorder %v469, 392
    %vm519 = vcmp.lt.s32.totalorder %v470, 392
    %vm520 = vcmp.lt.s32.totalorder %v471, 392
    %vm521 = vcmp.lt.s32.totalorder %v472, 392
    %vm522 = vcmp.lt.s32.totalorder %v473, 392
    %vm523 = vcmp.lt.s32.totalorder %v474, 392
    %vm524 = vcmp.lt.s32.totalorder %v475, 392
    %vm525 = vcmp.lt.s32.totalorder %v476, 392
    %vm526 = vcmp.lt.s32.totalorder %v477, 392
    %vm527 = vcmp.lt.s32.totalorder %v478, 392
    %vm528 = vcmp.lt.s32.totalorder %v479, 392
    %vm529 = vcmp.lt.s32.totalorder %v480, 392
    %vm530 = vcmp.lt.s32.totalorder %v481, 392
    %vm531 = vcmp.lt.s32.totalorder %v482, 392
    %vm532 = vcmp.lt.s32.totalorder %v483, 392
    %vm533 = vcmp.lt.s32.totalorder %v484, 392
    %vm534 = vcmp.lt.s32.totalorder %v485, 392
    %vm535 = vcmp.lt.s32.totalorder %v486, 392
    %vm536 = vcmp.lt.s32.totalorder %v487, 392
    %vm537 = vcmp.lt.s32.totalorder %v488, 392
    %vm538 = vcmp.lt.s32.totalorder %v489, 392
    %vm539 = vcmp.lt.s32.totalorder %v490, 392
    %vm540 = vcmp.lt.s32.totalorder %v491, 392
    %vm541 = vcmp.lt.s32.totalorder %v492, 392
    %v542 = vsel %vm493, 1, 0
    %v543 = vsel %vm494, 1, 0
    %v544 = vsel %vm495, 1, 0
    %v545 = vsel %vm496, 1, 0
    %v546 = vsel %vm497, 1, 0
    %v547 = vsel %vm498, 1, 0
    %v548 = vsel %vm499, 1, 0
    %v549 = vsel %vm500, 1, 0
    %v550 = vsel %vm501, 1, 0
    %v551 = vsel %vm502, 1, 0
    %v552 = vsel %vm503, 1, 0
    %v553 = vsel %vm504, 1, 0
    %v554 = vsel %vm505, 1, 0
    %v555 = vsel %vm506, 1, 0
    %v556 = vsel %vm507, 1, 0
    %v557 = vsel %vm508, 1, 0
    %v558 = vsel %vm509, 1, 0
    %v559 = vsel %vm510, 1, 0
    %v560 = vsel %vm511, 1, 0
    %v561 = vsel %vm512, 1, 0
    %v562 = vsel %vm513, 1, 0
    %v563 = vsel %vm514, 1, 0
    %v564 = vsel %vm515, 1, 0
    %v565 = vsel %vm516, 1, 0
    %v566 = vsel %vm517, 1, 0
    %v567 = vsel %vm518, 1, 0
    %v568 = vsel %vm519, 1, 0
    %v569 = vsel %vm520, 1, 0
    %v570 = vsel %vm521, 1, 0
    %v571 = vsel %vm522, 1, 0
    %v572 = vsel %vm523, 1, 0
    %v573 = vsel %vm524, 1, 0
    %v574 = vsel %vm525, 1, 0
    %v575 = vsel %vm526, 1, 0
    %v576 = vsel %vm527, 1, 0
    %v577 = vsel %vm528, 1, 0
    %v578 = vsel %vm529, 1, 0
    %v579 = vsel %vm530, 1, 0
    %v580 = vsel %vm531, 1, 0
    %v581 = vsel %vm532, 1, 0
    %v582 = vsel %vm533, 1, 0
    %v583 = vsel %vm534, 1, 0
    %v584 = vsel %vm535, 1, 0
    %v585 = vsel %vm536, 1, 0
    %v586 = vsel %vm537, 1, 0
    %v587 = vsel %vm538, 1, 0
    %v588 = vsel %vm539, 1, 0
    %v589 = vsel %vm540, 1, 0
    %v590 = vsel %vm541, 1, 0
    %vm591 = vcmp.eq.s32.totalorder %v542, 1
    %vm592 = vcmp.eq.s32.totalorder %v543, 1
    %vm593 = vcmp.eq.s32.totalorder %v544, 1
    %vm594 = vcmp.eq.s32.totalorder %v545, 1
    %vm595 = vcmp.eq.s32.totalorder %v546, 1
    %vm596 = vcmp.eq.s32.totalorder %v547, 1
    %vm597 = vcmp.eq.s32.totalorder %v548, 1
    %vm598 = vcmp.eq.s32.totalorder %v549, 1
    %vm599 = vcmp.eq.s32.totalorder %v550, 1
    %vm600 = vcmp.eq.s32.totalorder %v551, 1
    %vm601 = vcmp.eq.s32.totalorder %v552, 1
    %vm602 = vcmp.eq.s32.totalorder %v553, 1
    %vm603 = vcmp.eq.s32.totalorder %v554, 1
    %vm604 = vcmp.eq.s32.totalorder %v555, 1
    %vm605 = vcmp.eq.s32.totalorder %v556, 1
    %vm606 = vcmp.eq.s32.totalorder %v557, 1
    %vm607 = vcmp.eq.s32.totalorder %v558, 1
    %vm608 = vcmp.eq.s32.totalorder %v559, 1
    %vm609 = vcmp.eq.s32.totalorder %v560, 1
    %vm610 = vcmp.eq.s32.totalorder %v561, 1
    %vm611 = vcmp.eq.s32.totalorder %v562, 1
    %vm612 = vcmp.eq.s32.totalorder %v563, 1
    %vm613 = vcmp.eq.s32.totalorder %v564, 1
    %vm614 = vcmp.eq.s32.totalorder %v565, 1
    %vm615 = vcmp.eq.s32.totalorder %v566, 1
    %vm616 = vcmp.eq.s32.totalorder %v567, 1
    %vm617 = vcmp.eq.s32.totalorder %v568, 1
    %vm618 = vcmp.eq.s32.totalorder %v569, 1
    %vm619 = vcmp.eq.s32.totalorder %v570, 1
    %vm620 = vcmp.eq.s32.totalorder %v571, 1
    %vm621 = vcmp.eq.s32.totalorder %v572, 1
    %vm622 = vcmp.eq.s32.totalorder %v573, 1
    %vm623 = vcmp.eq.s32.totalorder %v574, 1
    %vm624 = vcmp.eq.s32.totalorder %v575, 1
    %vm625 = vcmp.eq.s32.totalorder %v576, 1
    %vm626 = vcmp.eq.s32.totalorder %v577, 1
    %vm627 = vcmp.eq.s32.totalorder %v578, 1
    %vm628 = vcmp.eq.s32.totalorder %v579, 1
    %vm629 = vcmp.eq.s32.totalorder %v580, 1
    %vm630 = vcmp.eq.s32.totalorder %v581, 1
    %vm631 = vcmp.eq.s32.totalorder %v582, 1
    %vm632 = vcmp.eq.s32.totalorder %v583, 1
    %vm633 = vcmp.eq.s32.totalorder %v584, 1
    %vm634 = vcmp.eq.s32.totalorder %v585, 1
    %vm635 = vcmp.eq.s32.totalorder %v586, 1
    %vm636 = vcmp.eq.s32.totalorder %v587, 1
    %vm637 = vcmp.eq.s32.totalorder %v588, 1
    %vm638 = vcmp.eq.s32.totalorder %v589, 1
    %vm639 = vcmp.eq.s32.totalorder %v590, 1
    %v640 = vsel %vm591, %v320, 0.0
    %v641 = vsel %vm592, %v322, 0.0
    %v642 = vsel %vm593, %v325, 0.0
    %v643 = vsel %vm594, %v327, 0.0
    %v644 = vsel %vm595, %v330, 0.0
    %v645 = vsel %vm596, %v332, 0.0
    %v646 = vsel %vm597, %v335, 0.0
    %v647 = vsel %vm598, %v337, 0.0
    %v648 = vsel %vm599, %v340, 0.0
    %v649 = vsel %vm600, %v342, 0.0
    %v650 = vsel %vm601, %v345, 0.0
    %v651 = vsel %vm602, %v347, 0.0
    %v652 = vsel %vm603, %v350, 0.0
    %v653 = vsel %vm604, %v352, 0.0
    %v654 = vsel %vm605, %v355, 0.0
    %v655 = vsel %vm606, %v357, 0.0
    %v656 = vsel %vm607, %v360, 0.0
    %v657 = vsel %vm608, %v362, 0.0
    %v658 = vsel %vm609, %v365, 0.0
    %v659 = vsel %vm610, %v367, 0.0
    %v660 = vsel %vm611, %v370, 0.0
    %v661 = vsel %vm612, %v372, 0.0
    %v662 = vsel %vm613, %v375, 0.0
    %v663 = vsel %vm614, %v377, 0.0
    %v664 = vsel %vm615, %v380, 0.0
    %v665 = vsel %vm616, %v382, 0.0
    %v666 = vsel %vm617, %v385, 0.0
    %v667 = vsel %vm618, %v387, 0.0
    %v668 = vsel %vm619, %v390, 0.0
    %v669 = vsel %vm620, %v392, 0.0
    %v670 = vsel %vm621, %v395, 0.0
    %v671 = vsel %vm622, %v397, 0.0
    %v672 = vsel %vm623, %v400, 0.0
    %v673 = vsel %vm624, %v402, 0.0
    %v674 = vsel %vm625, %v405, 0.0
    %v675 = vsel %vm626, %v407, 0.0
    %v676 = vsel %vm627, %v410, 0.0
    %v677 = vsel %vm628, %v412, 0.0
    %v678 = vsel %vm629, %v415, 0.0
    %v679 = vsel %vm630, %v417, 0.0
    %v680 = vsel %vm631, %v420, 0.0
    %v681 = vsel %vm632, %v422, 0.0
    %v682 = vsel %vm633, %v425, 0.0
    %v683 = vsel %vm634, %v427, 0.0
    %v684 = vsel %vm635, %v430, 0.0
    %v685 = vsel %vm636, %v432, 0.0
    %v686 = vsel %vm637, %v435, 0.0
    %v687 = vsel %vm638, %v437, 0.0
    %v688 = vsel %vm639, %v440, 0.0
    %v689 = vadd.f32 %v640, %v641
    %v690 = vadd.f32 %v689, %v642
    %v691 = vadd.f32 %v690, %v643
    %v692 = vadd.f32 %v691, %v644
    %v693 = vadd.f32 %v692, %v645
    %v694 = vadd.f32 %v693, %v646
    %v695 = vadd.f32 %v694, %v647
    %v696 = vadd.f32 %v695, %v648
    %v697 = vadd.f32 %v696, %v649
    %v698 = vadd.f32 %v697, %v650
    %v699 = vadd.f32 %v698, %v651
    %v700 = vadd.f32 %v699, %v652
    %v701 = vadd.f32 %v700, %v653
    %v702 = vadd.f32 %v701, %v654
    %v703 = vadd.f32 %v702, %v655
    %v704 = vadd.f32 %v703, %v656
    %v705 = vadd.f32 %v704, %v657
    %v706 = vadd.f32 %v705, %v658
    %v707 = vadd.f32 %v706, %v659
    %v708 = vadd.f32 %v707, %v660
    %v709 = vadd.f32 %v708, %v661
    %v710 = vadd.f32 %v709, %v662
    %v711 = vadd.f32 %v710, %v663
    %v712 = vadd.f32 %v711, %v664
    %v713 = vadd.f32 %v712, %v665
    %v714 = vadd.f32 %v713, %v666
    %v715 = vadd.f32 %v714, %v667
    %v716 = vadd.f32 %v715, %v668
    %v717 = vadd.f32 %v716, %v669
    %v718 = vadd.f32 %v717, %v670
    %v719 = vadd.f32 %v718, %v671
    %v720 = vadd.f32 %v719, %v672
    %v721 = vadd.f32 %v720, %v673
    %v722 = vadd.f32 %v721, %v674
    %v723 = vadd.f32 %v722, %v675
    %v724 = vadd.f32 %v723, %v676
    %v725 = vadd.f32 %v724, %v677
    %v726 = vadd.f32 %v725, %v678
    %v727 = vadd.f32 %v726, %v679
    %v728 = vadd.f32 %v727, %v680
    %v729 = vadd.f32 %v728, %v681
    %v730 = vadd.f32 %v729, %v682
    %v731 = vadd.f32 %v730, %v683
    %v732 = vadd.f32 %v731, %v684
    %v733 = vadd.f32 %v732, %v685
    %v734 = vadd.f32 %v733, %v686
    %v735 = vadd.f32 %v734, %v687
    %v736 = vadd.f32 %v735, %v688
    %v737 = vrot.slane %v736, 4
    %v738 = vadd.f32 %v736, %v737
    %v739 = vrot.slane %v738, 2
    %v740 = vadd.f32 %v738, %v739
    %v741 = vrot.slane %v740, 1
    %v742 = vadd.f32 %v740, %v741
    %v743 = vmul.f32 %v742, 0.0025510204
    %v744 = vsub.f32 %v320, %v743
    %v745 = vsub.f32 %v322, %v743
    %v746 = vsub.f32 %v325, %v743
    %v747 = vsub.f32 %v327, %v743
    %v748 = vsub.f32 %v330, %v743
    %v749 = vsub.f32 %v332, %v743
    %v750 = vsub.f32 %v335, %v743
    %v751 = vsub.f32 %v337, %v743
    %v752 = vsub.f32 %v340, %v743
    %v753 = vsub.f32 %v342, %v743
    %v754 = vsub.f32 %v345, %v743
    %v755 = vsub.f32 %v347, %v743
    %v756 = vsub.f32 %v350, %v743
    %v757 = vsub.f32 %v352, %v743
    %v758 = vsub.f32 %v355, %v743
    %v759 = vsub.f32 %v357, %v743
    %v760 = vsub.f32 %v360, %v743
    %v761 = vsub.f32 %v362, %v743
    %v762 = vsub.f32 %v365, %v743
    %v763 = vsub.f32 %v367, %v743
    %v764 = vsub.f32 %v370, %v743
    %v765 = vsub.f32 %v372, %v743
    %v766 = vsub.f32 %v375, %v743
    %v767 = vsub.f32 %v377, %v743
    %v768 = vsub.f32 %v380, %v743
    %v769 = vsub.f32 %v382, %v743
    %v770 = vsub.f32 %v385, %v743
    %v771 = vsub.f32 %v387, %v743
    %v772 = vsub.f32 %v390, %v743
    %v773 = vsub.f32 %v392, %v743
    %v774 = vsub.f32 %v395, %v743
    %v775 = vsub.f32 %v397, %v743
    %v776 = vsub.f32 %v400, %v743
    %v777 = vsub.f32 %v402, %v743
    %v778 = vsub.f32 %v405, %v743
    %v779 = vsub.f32 %v407, %v743
    %v780 = vsub.f32 %v410, %v743
    %v781 = vsub.f32 %v412, %v743
    %v782 = vsub.f32 %v415, %v743
    %v783 = vsub.f32 %v417, %v743
    %v784 = vsub.f32 %v420, %v743
    %v785 = vsub.f32 %v422, %v743
    %v786 = vsub.f32 %v425, %v743
    %v787 = vsub.f32 %v427, %v743
    %v788 = vsub.f32 %v430, %v743
    %v789 = vsub.f32 %v432, %v743
    %v790 = vsub.f32 %v435, %v743
    %v791 = vsub.f32 %v437, %v743
    %v792 = vsub.f32 %v440, %v743
    %v793 = vsel %vm591, %v744, 0.0
    %v794 = vsel %vm592, %v745, 0.0
    %v795 = vsel %vm593, %v746, 0.0
    %v796 = vsel %vm594, %v747, 0.0
    %v797 = vsel %vm595, %v748, 0.0
    %v798 = vsel %vm596, %v749, 0.0
    %v799 = vsel %vm597, %v750, 0.0
    %v800 = vsel %vm598, %v751, 0.0
    %v801 = vsel %vm599, %v752, 0.0
    %v802 = vsel %vm600, %v753, 0.0
    %v803 = vsel %vm601, %v754, 0.0
    %v804 = vsel %vm602, %v755, 0.0
    %v805 = vsel %vm603, %v756, 0.0
    %v806 = vsel %vm604, %v757, 0.0
    %v807 = vsel %vm605, %v758, 0.0
    %v808 = vsel %vm606, %v759, 0.0
    %v809 = vsel %vm607, %v760, 0.0
    %v810 = vsel %vm608, %v761, 0.0
    %v811 = vsel %vm609, %v762, 0.0
    %v812 = vsel %vm610, %v763, 0.0
    %v813 = vsel %vm611, %v764, 0.0
    %v814 = vsel %vm612, %v765, 0.0
    %v815 = vsel %vm613, %v766, 0.0
    %v816 = vsel %vm614, %v767, 0.0
    %v817 = vsel %vm615, %v768, 0.0
    %v818 = vsel %vm616, %v769, 0.0
    %v819 = vsel %vm617, %v770, 0.0
    %v820 = vsel %vm618, %v771, 0.0
    %v821 = vsel %vm619, %v772, 0.0
    %v822 = vsel %vm620, %v773, 0.0
    %v823 = vsel %vm621, %v774, 0.0
    %v824 = vsel %vm622, %v775, 0.0
    %v825 = vsel %vm623, %v776, 0.0
    %v826 = vsel %vm624, %v777, 0.0
    %v827 = vsel %vm625, %v778, 0.0
    %v828 = vsel %vm626, %v779, 0.0
    %v829 = vsel %vm627, %v780, 0.0
    %v830 = vsel %vm628, %v781, 0.0
    %v831 = vsel %vm629, %v782, 0.0
    %v832 = vsel %vm630, %v783, 0.0
    %v833 = vsel %vm631, %v784, 0.0
    %v834 = vsel %vm632, %v785, 0.0
    %v835 = vsel %vm633, %v786, 0.0
    %v836 = vsel %vm634, %v787, 0.0
    %v837 = vsel %vm635, %v788, 0.0
    %v838 = vsel %vm636, %v789, 0.0
    %v839 = vsel %vm637, %v790, 0.0
    %v840 = vsel %vm638, %v791, 0.0
    %v841 = vsel %vm639, %v792, 0.0
    %v842 = vmul.f32 %v793, %v793
    %v843 = vmul.f32 %v794, %v794
    %v844 = vmul.f32 %v795, %v795
    %v845 = vmul.f32 %v796, %v796
    %v846 = vmul.f32 %v797, %v797
    %v847 = vmul.f32 %v798, %v798
    %v848 = vmul.f32 %v799, %v799
    %v849 = vmul.f32 %v800, %v800
    %v850 = vmul.f32 %v801, %v801
    %v851 = vmul.f32 %v802, %v802
    %v852 = vmul.f32 %v803, %v803
    %v853 = vmul.f32 %v804, %v804
    %v854 = vmul.f32 %v805, %v805
    %v855 = vmul.f32 %v806, %v806
    %v856 = vmul.f32 %v807, %v807
    %v857 = vmul.f32 %v808, %v808
    %v858 = vmul.f32 %v809, %v809
    %v859 = vmul.f32 %v810, %v810
    %v860 = vmul.f32 %v811, %v811
    %v861 = vmul.f32 %v812, %v812
    %v862 = vmul.f32 %v813, %v813
    %v863 = vmul.f32 %v814, %v814
    %v864 = vmul.f32 %v815, %v815
    %v865 = vmul.f32 %v816, %v816
    %v866 = vmul.f32 %v817, %v817
    %v867 = vmul.f32 %v818, %v818
    %v868 = vmul.f32 %v819, %v819
    %v869 = vmul.f32 %v820, %v820
    %v870 = vmul.f32 %v821, %v821
    %v871 = vmul.f32 %v822, %v822
    %v872 = vmul.f32 %v823, %v823
    %v873 = vmul.f32 %v824, %v824
    %v874 = vmul.f32 %v825, %v825
    %v875 = vmul.f32 %v826, %v826
    %v876 = vmul.f32 %v827, %v827
    %v877 = vmul.f32 %v828, %v828
    %v878 = vmul.f32 %v829, %v829
    %v879 = vmul.f32 %v830, %v830
    %v880 = vmul.f32 %v831, %v831
    %v881 = vmul.f32 %v832, %v832
    %v882 = vmul.f32 %v833, %v833
    %v883 = vmul.f32 %v834, %v834
    %v884 = vmul.f32 %v835, %v835
    %v885 = vmul.f32 %v836, %v836
    %v886 = vmul.f32 %v837, %v837
    %v887 = vmul.f32 %v838, %v838
    %v888 = vmul.f32 %v839, %v839
    %v889 = vmul.f32 %v840, %v840
    %v890 = vmul.f32 %v841, %v841
    %v891 = vadd.f32 %v842, %v843
    %v892 = vadd.f32 %v891, %v844
    %v893 = vadd.f32 %v892, %v845
    %v894 = vadd.f32 %v893, %v846
    %v895 = vadd.f32 %v894, %v847
    %v896 = vadd.f32 %v895, %v848
    %v897 = vadd.f32 %v896, %v849
    %v898 = vadd.f32 %v897, %v850
    %v899 = vadd.f32 %v898, %v851
    %v900 = vadd.f32 %v899, %v852
    %v901 = vadd.f32 %v900, %v853
    %v902 = vadd.f32 %v901, %v854
    %v903 = vadd.f32 %v902, %v855
    %v904 = vadd.f32 %v903, %v856
    %v905 = vadd.f32 %v904, %v857
    %v906 = vadd.f32 %v905, %v858
    %v907 = vadd.f32 %v906, %v859
    %v908 = vadd.f32 %v907, %v860
    %v909 = vadd.f32 %v908, %v861
    %v910 = vadd.f32 %v909, %v862
    %v911 = vadd.f32 %v910, %v863
    %v912 = vadd.f32 %v911, %v864
    %v913 = vadd.f32 %v912, %v865
    %v914 = vadd.f32 %v913, %v866
    %v915 = vadd.f32 %v914, %v867
    %v916 = vadd.f32 %v915, %v868
    %v917 = vadd.f32 %v916, %v869
    %v918 = vadd.f32 %v917, %v870
    %v919 = vadd.f32 %v918, %v871
    %v920 = vadd.f32 %v919, %v872
    %v921 = vadd.f32 %v920, %v873
    %v922 = vadd.f32 %v921, %v874
    %v923 = vadd.f32 %v922, %v875
    %v924 = vadd.f32 %v923, %v876
    %v925 = vadd.f32 %v924, %v877
    %v926 = vadd.f32 %v925, %v878
    %v927 = vadd.f32 %v926, %v879
    %v928 = vadd.f32 %v927, %v880
    %v929 = vadd.f32 %v928, %v881
    %v930 = vadd.f32 %v929, %v882
    %v931 = vadd.f32 %v930, %v883
    %v932 = vadd.f32 %v931, %v884
    %v933 = vadd.f32 %v932, %v885
    %v934 = vadd.f32 %v933, %v886
    %v935 = vadd.f32 %v934, %v887
    %v936 = vadd.f32 %v935, %v888
    %v937 = vadd.f32 %v936, %v889
    %v938 = vadd.f32 %v937, %v890
    %v939 = vrot.slane %v938, 4
    %v940 = vadd.f32 %v938, %v939
    %v941 = vrot.slane %v940, 2
    %v942 = vadd.f32 %v940, %v941
    %v943 = vrot.slane %v942, 1
    %v944 = vadd.f32 %v942, %v943
    %v945 = vmul.f32 %v944, 0.0025510204
    %v946 = vld [vmem:[%s2] sm:$0x1]
    %v947 = vadd.f32 %v945, 1e-05
    %v948 = vrsqrt.pop %v947
    %v949 = vmul.f32 %v948, %v947
    %v950 = vmul.f32 %v949, %v948
    %v951 = vmul.f32 0.5, %v950
    %v952 = vsub.f32 1.5, %v951
    %v953 = vmul.f32 %v948, %v952
    %vm954 = vweird.f32 %v947
    %vm955 = vweird.f32 %v948
    %vm956 = vmor %vm954, %vm955
    %v957 = vsel %vm956, %v948, %v953
    %v958 = vmul.f32 %v946, %v957
    %v959 = vld [vmem:[%s3] sm:$0x1]
    %v960 = vmul.f32 %v743, %v958
    %v961 = vsub.f32 %v959, %v960
    %v963 = vperm.slane %v958, 0
    %v965 = vmul.f32 %v320, %v963
    %v966 = vmul.f32 %v322, %v963
    %v967 = vmul.f32 %v325, %v963
    %v968 = vmul.f32 %v327, %v963
    %v969 = vmul.f32 %v330, %v963
    %v970 = vmul.f32 %v332, %v963
    %v971 = vmul.f32 %v335, %v963
    %v972 = vmul.f32 %v337, %v963
    %v973 = vmul.f32 %v340, %v963
    %v974 = vmul.f32 %v342, %v963
    %v975 = vmul.f32 %v345, %v963
    %v976 = vmul.f32 %v347, %v963
    %v977 = vmul.f32 %v350, %v963
    %v978 = vmul.f32 %v352, %v963
    %v979 = vmul.f32 %v355, %v963
    %v980 = vmul.f32 %v357, %v963
    %v981 = vmul.f32 %v360, %v963
    %v982 = vmul.f32 %v362, %v963
    %v983 = vmul.f32 %v365, %v963
    %v984 = vmul.f32 %v367, %v963
    %v985 = vmul.f32 %v370, %v963
    %v986 = vmul.f32 %v372, %v963
    %v987 = vmul.f32 %v375, %v963
    %v988 = vmul.f32 %v377, %v963
    %v989 = vmul.f32 %v380, %v963
    %v990 = vmul.f32 %v382, %v963
    %v991 = vmul.f32 %v385, %v963
    %v992 = vmul.f32 %v387, %v963
    %v993 = vmul.f32 %v390, %v963
    %v994 = vmul.f32 %v392, %v963
    %v995 = vmul.f32 %v395, %v963
    %v996 = vmul.f32 %v397, %v963
    %v997 = vmul.f32 %v400, %v963
    %v998 = vmul.f32 %v402, %v963
    %v999 = vmul.f32 %v405, %v963
    %v1000 = vmul.f32 %v407, %v963
    %v1001 = vmul.f32 %v410, %v963
    %v1002 = vmul.f32 %v412, %v963
    %v1003 = vmul.f32 %v415, %v963
    %v1004 = vmul.f32 %v417, %v963
    %v1005 = vmul.f32 %v420, %v963
    %v1006 = vmul.f32 %v422, %v963
    %v1007 = vmul.f32 %v425, %v963
    %v1008 = vmul.f32 %v427, %v963
    %v1009 = vmul.f32 %v430, %v963
    %v1010 = vmul.f32 %v432, %v963
    %v1011 = vmul.f32 %v435, %v963
    %v1012 = vmul.f32 %v437, %v963
    %v1013 = vmul.f32 %v440, %v963
    %v1015 = vperm.slane %v961, 0
    %v1017 = vadd.f32 %v965, %v1015
    %v1018 = vadd.f32 %v966, %v1015
    %v1019 = vadd.f32 %v967, %v1015
    %v1020 = vadd.f32 %v968, %v1015
    %v1021 = vadd.f32 %v969, %v1015
    %v1022 = vadd.f32 %v970, %v1015
    %v1023 = vadd.f32 %v971, %v1015
    %v1024 = vadd.f32 %v972, %v1015
    %v1025 = vadd.f32 %v973, %v1015
    %v1026 = vadd.f32 %v974, %v1015
    %v1027 = vadd.f32 %v975, %v1015
    %v1028 = vadd.f32 %v976, %v1015
    %v1029 = vadd.f32 %v977, %v1015
    %v1030 = vadd.f32 %v978, %v1015
    %v1031 = vadd.f32 %v979, %v1015
    %v1032 = vadd.f32 %v980, %v1015
    %v1033 = vadd.f32 %v981, %v1015
    %v1034 = vadd.f32 %v982, %v1015
    %v1035 = vadd.f32 %v983, %v1015
    %v1036 = vadd.f32 %v984, %v1015
    %v1037 = vadd.f32 %v985, %v1015
    %v1038 = vadd.f32 %v986, %v1015
    %v1039 = vadd.f32 %v987, %v1015
    %v1040 = vadd.f32 %v988, %v1015
    %v1041 = vadd.f32 %v989, %v1015
    %v1042 = vadd.f32 %v990, %v1015
    %v1043 = vadd.f32 %v991, %v1015
    %v1044 = vadd.f32 %v992, %v1015
    %v1045 = vadd.f32 %v993, %v1015
    %v1046 = vadd.f32 %v994, %v1015
    %v1047 = vadd.f32 %v995, %v1015
    %v1048 = vadd.f32 %v996, %v1015
    %v1049 = vadd.f32 %v997, %v1015
    %v1050 = vadd.f32 %v998, %v1015
    %v1051 = vadd.f32 %v999, %v1015
    %v1052 = vadd.f32 %v1000, %v1015
    %v1053 = vadd.f32 %v1001, %v1015
    %v1054 = vadd.f32 %v1002, %v1015
    %v1055 = vadd.f32 %v1003, %v1015
    %v1056 = vadd.f32 %v1004, %v1015
    %v1057 = vadd.f32 %v1005, %v1015
    %v1058 = vadd.f32 %v1006, %v1015
    %v1059 = vadd.f32 %v1007, %v1015
    %v1060 = vadd.f32 %v1008, %v1015
    %v1061 = vadd.f32 %v1009, %v1015
    %v1062 = vadd.f32 %v1010, %v1015
    %v1063 = vadd.f32 %v1011, %v1015
    %v1064 = vadd.f32 %v1012, %v1015
    %v1065 = vadd.f32 %v1013, %v1015
    %v1066 = vmax.f32 %v1017, 0.0
    %v1067 = vmax.f32 %v1018, 0.0
    %v1068 = vmax.f32 %v1019, 0.0
    %v1069 = vmax.f32 %v1020, 0.0
    %v1070 = vmax.f32 %v1021, 0.0
    %v1071 = vmax.f32 %v1022, 0.0
    %v1072 = vmax.f32 %v1023, 0.0
    %v1073 = vmax.f32 %v1024, 0.0
    %v1074 = vmax.f32 %v1025, 0.0
    %v1075 = vmax.f32 %v1026, 0.0
    %v1076 = vmax.f32 %v1027, 0.0
    %v1077 = vmax.f32 %v1028, 0.0
    %v1078 = vmax.f32 %v1029, 0.0
    %v1079 = vmax.f32 %v1030, 0.0
    %v1080 = vmax.f32 %v1031, 0.0
    %v1081 = vmax.f32 %v1032, 0.0
    %v1082 = vmax.f32 %v1033, 0.0
    %v1083 = vmax.f32 %v1034, 0.0
    %v1084 = vmax.f32 %v1035, 0.0
    %v1085 = vmax.f32 %v1036, 0.0
    %v1086 = vmax.f32 %v1037, 0.0
    %v1087 = vmax.f32 %v1038, 0.0
    %v1088 = vmax.f32 %v1039, 0.0
    %v1089 = vmax.f32 %v1040, 0.0
    %v1090 = vmax.f32 %v1041, 0.0
    %v1091 = vmax.f32 %v1042, 0.0
    %v1092 = vmax.f32 %v1043, 0.0
    %v1093 = vmax.f32 %v1044, 0.0
    %v1094 = vmax.f32 %v1045, 0.0
    %v1095 = vmax.f32 %v1046, 0.0
    %v1096 = vmax.f32 %v1047, 0.0
    %v1097 = vmax.f32 %v1048, 0.0
    %v1098 = vmax.f32 %v1049, 0.0
    %v1099 = vmax.f32 %v1050, 0.0
    %v1100 = vmax.f32 %v1051, 0.0
    %v1101 = vmax.f32 %v1052, 0.0
    %v1102 = vmax.f32 %v1053, 0.0
    %v1103 = vmax.f32 %v1054, 0.0
    %v1104 = vmax.f32 %v1055, 0.0
    %v1105 = vmax.f32 %v1056, 0.0
    %v1106 = vmax.f32 %v1057, 0.0
    %v1107 = vmax.f32 %v1058, 0.0
    %v1108 = vmax.f32 %v1059, 0.0
    %v1109 = vmax.f32 %v1060, 0.0
    %v1110 = vmax.f32 %v1061, 0.0
    %v1111 = vmax.f32 %v1062, 0.0
    %v1112 = vmax.f32 %v1063, 0.0
    %v1113 = vmax.f32 %v1064, 0.0
    %v1114 = vmax.f32 %v1065, 0.0
    %vm1115 = vcmask 64512
    %1116 = vst.msk [vmem:[%s4] sm:$0xff] %vm1115, %v1066
    %1117 = vst.msk [vmem:[%s4 + $0x8] sm:$0xff] %vm1115, %v1067
    %1118 = vst.msk [vmem:[%s4 + $0x10] sm:$0xff] %vm1115, %v1068
    %1119 = vst.msk [vmem:[%s4 + $0x18] sm:$0xff] %vm1115, %v1069
    %1120 = vst.msk [vmem:[%s4 + $0x20] sm:$0xff] %vm1115, %v1070
    %1121 = vst.msk [vmem:[%s4 + $0x28] sm:$0xff] %vm1115, %v1071
    %1122 = vst.msk [vmem:[%s4 + $0x30] sm:$0xff] %vm1115, %v1072
    %1123 = vst.msk [vmem:[%s4 + $0x38] sm:$0xff] %vm1115, %v1073
    %1124 = vst.msk [vmem:[%s4 + $0x40] sm:$0xff] %vm1115, %v1074
    %1125 = vst.msk [vmem:[%s4 + $0x48] sm:$0xff] %vm1115, %v1075
    %1126 = vst.msk [vmem:[%s4 + $0x50] sm:$0xff] %vm1115, %v1076
    %1127 = vst.msk [vmem:[%s4 + $0x58] sm:$0xff] %vm1115, %v1077
    %1128 = vst.msk [vmem:[%s4 + $0x60] sm:$0xff] %vm1115, %v1078
    %1129 = vst.msk [vmem:[%s4 + $0x68] sm:$0xff] %vm1115, %v1079
    %1130 = vst.msk [vmem:[%s4 + $0x70] sm:$0xff] %vm1115, %v1080
    %1131 = vst.msk [vmem:[%s4 + $0x78] sm:$0xff] %vm1115, %v1081
    %1132 = vst.msk [vmem:[%s4 + $0x80] sm:$0xff] %vm1115, %v1082
    %1133 = vst.msk [vmem:[%s4 + $0x88] sm:$0xff] %vm1115, %v1083
    %1134 = vst.msk [vmem:[%s4 + $0x90] sm:$0xff] %vm1115, %v1084
    %1135 = vst.msk [vmem:[%s4 + $0x98] sm:$0xff] %vm1115, %v1085
    %1136 = vst.msk [vmem:[%s4 + $0xa0] sm:$0xff] %vm1115, %v1086
    %1137 = vst.msk [vmem:[%s4 + $0xa8] sm:$0xff] %vm1115, %v1087
    %1138 = vst.msk [vmem:[%s4 + $0xb0] sm:$0xff] %vm1115, %v1088
    %1139 = vst.msk [vmem:[%s4 + $0xb8] sm:$0xff] %vm1115, %v1089
    %1140 = vst.msk [vmem:[%s4 + $0xc0] sm:$0xff] %vm1115, %v1090
    %1141 = vst.msk [vmem:[%s4 + $0xc8] sm:$0xff] %vm1115, %v1091
    %1142 = vst.msk [vmem:[%s4 + $0xd0] sm:$0xff] %vm1115, %v1092
    %1143 = vst.msk [vmem:[%s4 + $0xd8] sm:$0xff] %vm1115, %v1093
    %1144 = vst.msk [vmem:[%s4 + $0xe0] sm:$0xff] %vm1115, %v1094
    %1145 = vst.msk [vmem:[%s4 + $0xe8] sm:$0xff] %vm1115, %v1095
    %1146 = vst.msk [vmem:[%s4 + $0xf0] sm:$0xff] %vm1115, %v1096
    %1147 = vst.msk [vmem:[%s4 + $0xf8] sm:$0xff] %vm1115, %v1097
    %1148 = vst.msk [vmem:[%s4 + $0x100] sm:$0xff] %vm1115, %v1098
    %1149 = vst.msk [vmem:[%s4 + $0x108] sm:$0xff] %vm1115, %v1099
    %1150 = vst.msk [vmem:[%s4 + $0x110] sm:$0xff] %vm1115, %v1100
    %1151 = vst.msk [vmem:[%s4 + $0x118] sm:$0xff] %vm1115, %v1101
    %1152 = vst.msk [vmem:[%s4 + $0x120] sm:$0xff] %vm1115, %v1102
    %1153 = vst.msk [vmem:[%s4 + $0x128] sm:$0xff] %vm1115, %v1103
    %1154 = vst.msk [vmem:[%s4 + $0x130] sm:$0xff] %vm1115, %v1104
    %1155 = vst.msk [vmem:[%s4 + $0x138] sm:$0xff] %vm1115, %v1105
    %1156 = vst.msk [vmem:[%s4 + $0x140] sm:$0xff] %vm1115, %v1106
    %1157 = vst.msk [vmem:[%s4 + $0x148] sm:$0xff] %vm1115, %v1107
    %1158 = vst.msk [vmem:[%s4 + $0x150] sm:$0xff] %vm1115, %v1108
    %1159 = vst.msk [vmem:[%s4 + $0x158] sm:$0xff] %vm1115, %v1109
    %1160 = vst.msk [vmem:[%s4 + $0x160] sm:$0xff] %vm1115, %v1110
    %1161 = vst.msk [vmem:[%s4 + $0x168] sm:$0xff] %vm1115, %v1111
    %1162 = vst.msk [vmem:[%s4 + $0x170] sm:$0xff] %vm1115, %v1112
    %1163 = vst.msk [vmem:[%s4 + $0x178] sm:$0xff] %vm1115, %v1113
    %1164 = vst.msk [vmem:[%s4 + $0x180] sm:$0xff] %vm1115, %v1114
    // Predicated region
    $region26: #{tpu_custom_call.1} parent=1 // pred_check
      _
    $region27: #{tpu_custom_call.1} parent=1 // pred_check_branch
      %1166 = sbr.rel (0) target = $region29
    $region28: #{tpu_custom_call.1} parent=1 // pred_region
      _
    $region29: #{tpu_custom_call.1} parent=1 // pred_fallthru
      _
    // Predicated region
    $region30: #{tpu_custom_call.1} parent=1 // pred_check
      _
    $region31: #{tpu_custom_call.1} parent=1 // pred_check_branch
      %1168 = sbr.rel (0) target = $region33
    $region32: #{tpu_custom_call.1} parent=1 // pred_region
      _
    $region33: #{tpu_custom_call.1} parent=1 // pred_fallthru
      _
    %1169 = vsyncpa [#allocation3], 1
    %1170 = vsyncpa [#allocation5], 1

</llo_original>
